<compile_context>
chip_gen: v7x
topology: tpu7x:2x2x1
jax: 0.10.0
libtpu: 0.0.40
codegen_flags: <defaults>
</compile_context>

<pallas_src>
import functools
import math

import jax
import jax.numpy as jnp
from jax.experimental import pallas as pl
from jax.experimental.pallas import tpu as pltpu


def _round_up(x, m):
    return (x + m - 1) // m * m


def _plnet_kernel(x_ref, wpl_ref, bpl_ref, w1_ref, b1_ref, w2_ref, b2_ref, out_ref):
    # stage 1: merged (block-diagonal) protein/ligand Linear + outer ReLU.
    # bf16 matmul inputs, f32 accumulation, f32 bias/ReLU.
    h1 = jnp.dot(x_ref[...], wpl_ref[...], preferred_element_type=jnp.float32)
    h1 = jnp.maximum(h1 + bpl_ref[...], 0.0)
    # stage 2: LinearBlock Linear(hidden, 16) + ReLU.
    h2 = jnp.dot(h1.astype(jnp.bfloat16), w1_ref[...],
                 preferred_element_type=jnp.float32)
    h2 = jnp.maximum(h2 + b1_ref[...], 0.0)
    # stage 3: Linear(16, out), out lanes padded to 128 for lane-dense stores.
    y = jnp.dot(h2.astype(jnp.bfloat16), w2_ref[...],
                preferred_element_type=jnp.float32)
    out_ref[...] = (y + b2_ref[...]).astype(out_ref.dtype)


def protein_ligand_forward(protein_x, ligand_x, params, *, tile_b=512):
    """Fused forward pass. protein_x: (B, Pin), ligand_x: (B, Lin). Returns (B, OUT) f32."""
    B, Pin = protein_x.shape
    Lin = ligand_x.shape[1]
    Hp = params["wp"].shape[1]
    Hl = params["wl"].shape[1]
    OUT = params["w2"].shape[1]
    Din = Pin + Lin
    H = Hp + Hl

    # --- wrapper-side packing: fused concat + block-diagonal stage-1 weight ---
    x_cat = jnp.concatenate([protein_x, ligand_x], axis=-1)          # (B, Din)
    wpl = jnp.zeros((Din, H), jnp.float32)
    wpl = wpl.at[:Pin, :Hp].set(params["wp"]).at[Pin:, Hp:].set(params["wl"])
    bpl = jnp.concatenate([params["bp"], params["bl"]], axis=-1)     # (1, H)

    # pad narrow output to a full 128-lane slab; slice back after the call
    OUT_PAD = _round_up(OUT, 128)
    w2p = jnp.zeros((params["w2"].shape[0], OUT_PAD), jnp.float32)
    w2p = w2p.at[:, :OUT].set(params["w2"])
    b2p = jnp.zeros((1, OUT_PAD), jnp.float32).at[:, :OUT].set(params["b2"])

    # batch tiling: TB multiple of 16 (bf16 sublane tile); pad batch to multiple of TB
    TB = _round_up(min(tile_b, _round_up(B, 16)), 16)
    B_pad = _round_up(B, TB)
    if B_pad != B:
        x_cat = jnp.pad(x_cat, ((0, B_pad - B), (0, 0)))
    n_tiles = B_pad // TB

    # bf16 for DMA + MXU inputs; biases stay f32 for f32 elementwise math
    x_cat = x_cat.astype(jnp.bfloat16)
    wpl = wpl.astype(jnp.bfloat16)
    w1 = params["w1"].astype(jnp.bfloat16)
    w2p = w2p.astype(jnp.bfloat16)
    bpl = bpl.astype(jnp.float32)
    b1 = params["b1"].astype(jnp.float32)

    out = pl.pallas_call(
        _plnet_kernel,
        out_shape=jax.ShapeDtypeStruct((B_pad, OUT_PAD), jnp.float32),
        grid=(n_tiles,),
        in_specs=[
            pl.BlockSpec((TB, Din), lambda i: (i, 0)),      # activations (batch-tiled)
            pl.BlockSpec((Din, H), lambda i: (0, 0)),       # block-diag stage-1 weight
            pl.BlockSpec((1, H), lambda i: (0, 0)),         # fused branch biases
            pl.BlockSpec((H, 16), lambda i: (0, 0)),        # LinearBlock W1
            pl.BlockSpec((1, 16), lambda i: (0, 0)),        # b1
            pl.BlockSpec((16, OUT_PAD), lambda i: (0, 0)),  # padded W2
            pl.BlockSpec((1, OUT_PAD), lambda i: (0, 0)),   # padded b2
        ],
        out_specs=pl.BlockSpec((TB, OUT_PAD), lambda i: (i, 0)),
        compiler_params=pltpu.CompilerParams(
            dimension_semantics=("parallel",)),
    )(x_cat, wpl, bpl, w1, b1, w2p, b2p)

    return out[:B, :OUT]


# ---------------- deterministic parameter construction ----------------

def _xavier_uniform(key, fan_in, fan_out):
    bound = math.sqrt(6.0 / (fan_in + fan_out))
    # stored as (in, out) so forward is x @ W  (== PyTorch x @ W.T with W (out,in))
    return jax.random.uniform(key, (fan_in, fan_out), jnp.float32, -bound, bound)


def _torch_bias(key, fan_in, fan_out):
    bound = 1.0 / math.sqrt(fan_in)
    return jax.random.uniform(key, (1, fan_out), jnp.float32, -bound, bound)


def make_params(key, protein_in, ligand_in, hp, hl, out_features):
    hidden_features = hp + hl
    ks = jax.random.split(key, 8)
    return {
        "wp": _xavier_uniform(ks[0], protein_in, hp),
        "bp": _torch_bias(ks[1], protein_in, hp),
        "wl": _xavier_uniform(ks[2], ligand_in, hl),
        "bl": _torch_bias(ks[3], ligand_in, hl),
        "w1": _xavier_uniform(ks[4], hidden_features, 16),
        "b1": _torch_bias(ks[5], hidden_features, 16),
        "w2": _xavier_uniform(ks[6], 16, out_features),
        "b2": _torch_bias(ks[7], 16, out_features),
    }


def reference_forward(protein_x, ligand_x, params):
    """Plain-JAX f32 reference mirroring the PyTorch forward."""
    p = jax.nn.relu(protein_x @ params["wp"] + params["bp"])
    l = jax.nn.relu(ligand_x @ params["wl"] + params["bl"])
    combined = jnp.concatenate([p, l], axis=-1)
    h = jax.nn.relu(combined @ params["w1"] + params["b1"])
    return h @ params["w2"] + params["b2"]


def reference_forward_bf16(protein_x, ligand_x, params):
    """Reference that mirrors the kernel's bf16-input / f32-accumulate numerics."""
    bf = jnp.bfloat16
    def dot(a, w):
        return jnp.dot(a.astype(bf), w.astype(bf), preferred_element_type=jnp.float32)
    p = jax.nn.relu(dot(protein_x, params["wp"]) + params["bp"])
    l = jax.nn.relu(dot(ligand_x, params["wl"]) + params["bl"])
    combined = jnp.concatenate([p, l], axis=-1)
    h = jax.nn.relu(dot(combined, params["w1"]) + params["b1"])
    return dot(h, params["w2"]) + params["b2"]


if __name__ == "__main__":
    key = jax.random.PRNGKey(0)
    k_param, k_prot, k_lig = jax.random.split(key, 3)

    B = 8            # batch
    PROTEIN_IN = 32  # protein feature dim
    LIGAND_IN = 24   # ligand feature dim
    HP, HL = 16, 16  # per-branch output dims -> hidden_features = 32
    OUT = 4          # out_features

    params = make_params(k_param, PROTEIN_IN, LIGAND_IN, HP, HL, OUT)
    protein_x = jax.random.normal(k_prot, (B, PROTEIN_IN), jnp.float32)
    ligand_x = jax.random.normal(k_lig, (B, LIGAND_IN), jnp.float32)

    fwd = jax.jit(functools.partial(protein_ligand_forward, tile_b=512))
    out = jax.block_until_ready(fwd(protein_x, ligand_x, params))

    assert out.shape == (B, OUT)
    ref_bf16 = reference_forward_bf16(protein_x, ligand_x, params)
    ref_f32 = reference_forward(protein_x, ligand_x, params)
    assert jnp.allclose(out, ref_bf16, atol=1e-2, rtol=1e-2), "mismatch vs bf16 reference"
    assert jnp.allclose(out, ref_f32, atol=1e-1, rtol=1e-1), "mismatch vs f32 reference"

    print("KERNEL_OK")
</pallas_src>

<mosaic_0001>
module attributes {stable_mosaic.version = 11 : i64} {
  func.func @_plnet_kernel(%arg0: i32, %arg1: memref<16x56xbf16, #tpu.memory_space<vmem>>, %arg2: memref<56x32xbf16, #tpu.memory_space<vmem>>, %arg3: memref<1x32xf32, #tpu.memory_space<vmem>>, %arg4: memref<32x16xbf16, #tpu.memory_space<vmem>>, %arg5: memref<1x16xf32, #tpu.memory_space<vmem>>, %arg6: memref<16x128xbf16, #tpu.memory_space<vmem>>, %arg7: memref<1x128xf32, #tpu.memory_space<vmem>>, %arg8: memref<16x128xf32, #tpu.memory_space<vmem>>) attributes {dimension_semantics = [#tpu.dimension_semantics<parallel>], iteration_bounds = array<i64: 1>, scalar_prefetch = 0 : i64, scratch_operands = 0 : i64, tpu.core_type = #tpu.core_type<tc>, window_params = [{transform_indices = @transform_0, window_bounds = array<i64: 16, 56>}, {pipeline_mode = #tpu.pipeline_mode<synchronous>, transform_indices = @transform_1, window_bounds = array<i64: 56, 32>}, {pipeline_mode = #tpu.pipeline_mode<synchronous>, transform_indices = @transform_2, window_bounds = array<i64: 1, 32>}, {pipeline_mode = #tpu.pipeline_mode<synchronous>, transform_indices = @transform_3, window_bounds = array<i64: 32, 16>}, {pipeline_mode = #tpu.pipeline_mode<synchronous>, transform_indices = @transform_4, window_bounds = array<i64: 1, 16>}, {pipeline_mode = #tpu.pipeline_mode<synchronous>, transform_indices = @transform_5, window_bounds = array<i64: 16, 128>}, {pipeline_mode = #tpu.pipeline_mode<synchronous>, transform_indices = @transform_6, window_bounds = array<i64: 1, 128>}, {transform_indices = @transform_7, window_bounds = array<i64: 16, 128>}]} {
    %c0 = arith.constant 0 : index
    %c0_0 = arith.constant 0 : index
    %0 = vector.load %arg1[%c0, %c0_0] : memref<16x56xbf16, #tpu.memory_space<vmem>>, vector<16x56xbf16>
    %c0_1 = arith.constant 0 : index
    %c0_2 = arith.constant 0 : index
    %1 = vector.load %arg2[%c0_1, %c0_2] : memref<56x32xbf16, #tpu.memory_space<vmem>>, vector<56x32xbf16>
    %cst = arith.constant dense<0.000000e+00> : vector<16x32xf32>
    %2 = tpu.matmul %0, %1, %cst {dimension_numbers = #tpu.dot_dimension_numbers<[1], [0], [0], [1], [0, 0, 1, 1], [], []>} : vector<16x56xbf16>, vector<56x32xbf16>, vector<16x32xf32> -> vector<16x32xf32>
    %c0_3 = arith.constant 0 : index
    %c0_4 = arith.constant 0 : index
    %3 = vector.load %arg3[%c0_3, %c0_4] : memref<1x32xf32, #tpu.memory_space<vmem>>, vector<1x32xf32>
    %4 = vector.broadcast %3 : vector<1x32xf32> to vector<16x32xf32>
    %5 = arith.addf %2, %4 : vector<16x32xf32>
    %cst_5 = arith.constant 0.000000e+00 : f32
    %6 = vector.broadcast %cst_5 : f32 to vector<16x32xf32>
    %7 = arith.maximumf %5, %6 : vector<16x32xf32>
    %8 = arith.truncf %7 : vector<16x32xf32> to vector<16x32xbf16>
    %c0_6 = arith.constant 0 : index
    %c0_7 = arith.constant 0 : index
    %9 = vector.load %arg4[%c0_6, %c0_7] : memref<32x16xbf16, #tpu.memory_space<vmem>>, vector<32x16xbf16>
    %cst_8 = arith.constant dense<0.000000e+00> : vector<16x16xf32>
    %10 = tpu.matmul %8, %9, %cst_8 {dimension_numbers = #tpu.dot_dimension_numbers<[1], [0], [0], [1], [0, 0, 1, 1], [], []>} : vector<16x32xbf16>, vector<32x16xbf16>, vector<16x16xf32> -> vector<16x16xf32>
    %c0_9 = arith.constant 0 : index
    %c0_10 = arith.constant 0 : index
    %11 = vector.load %arg5[%c0_9, %c0_10] : memref<1x16xf32, #tpu.memory_space<vmem>>, vector<1x16xf32>
    %12 = vector.broadcast %11 : vector<1x16xf32> to vector<16x16xf32>
    %13 = arith.addf %10, %12 : vector<16x16xf32>
    %cst_11 = arith.constant 0.000000e+00 : f32
    %14 = vector.broadcast %cst_11 : f32 to vector<16x16xf32>
    %15 = arith.maximumf %13, %14 : vector<16x16xf32>
    %16 = arith.truncf %15 : vector<16x16xf32> to vector<16x16xbf16>
    %c0_12 = arith.constant 0 : index
    %c0_13 = arith.constant 0 : index
    %17 = vector.load %arg6[%c0_12, %c0_13] : memref<16x128xbf16, #tpu.memory_space<vmem>>, vector<16x128xbf16>
    %cst_14 = arith.constant dense<0.000000e+00> : vector<16x128xf32>
    %18 = tpu.matmul %16, %17, %cst_14 {dimension_numbers = #tpu.dot_dimension_numbers<[1], [0], [0], [1], [0, 0, 1, 1], [], []>} : vector<16x16xbf16>, vector<16x128xbf16>, vector<16x128xf32> -> vector<16x128xf32>
    %c0_15 = arith.constant 0 : index
    %c0_16 = arith.constant 0 : index
    %19 = vector.load %arg7[%c0_15, %c0_16] : memref<1x128xf32, #tpu.memory_space<vmem>>, vector<1x128xf32>
    %20 = vector.broadcast %19 : vector<1x128xf32> to vector<16x128xf32>
    %21 = arith.addf %18, %20 : vector<16x128xf32>
    %c0_17 = arith.constant 0 : index
    %c0_18 = arith.constant 0 : index
    %22 = vector.load %arg8[%c0_17, %c0_18] : memref<16x128xf32, #tpu.memory_space<vmem>>, vector<16x128xf32>
    tpu.vector_store %arg8[%c0_17, %c0_18], %21 {strides = array<i32>} : memref<16x128xf32, #tpu.memory_space<vmem>>, vector<16x128xf32>,
    return
  }
  func.func @transform_0(%arg0: i32) -> (i32, i32) {
    %c0_i32 = arith.constant 0 : i32
    %c0_i32_0 = arith.constant 0 : i32
    return %arg0, %c0_i32 : i32, i32
  }
  func.func @transform_1(%arg0: i32) -> (i32, i32) {
    %c0_i32 = arith.constant 0 : i32
    %c0_i32_0 = arith.constant 0 : i32
    %c0_i32_1 = arith.constant 0 : i32
    return %c0_i32, %c0_i32_0 : i32, i32
  }
  func.func @transform_2(%arg0: i32) -> (i32, i32) {
    %c0_i32 = arith.constant 0 : i32
    %c0_i32_0 = arith.constant 0 : i32
    %c0_i32_1 = arith.constant 0 : i32
    return %c0_i32, %c0_i32_0 : i32, i32
  }
  func.func @transform_3(%arg0: i32) -> (i32, i32) {
    %c0_i32 = arith.constant 0 : i32
    %c0_i32_0 = arith.constant 0 : i32
    %c0_i32_1 = arith.constant 0 : i32
    return %c0_i32, %c0_i32_0 : i32, i32
  }
  func.func @transform_4(%arg0: i32) -> (i32, i32) {
    %c0_i32 = arith.constant 0 : i32
    %c0_i32_0 = arith.constant 0 : i32
    %c0_i32_1 = arith.constant 0 : i32
    return %c0_i32, %c0_i32_0 : i32, i32
  }
  func.func @transform_5(%arg0: i32) -> (i32, i32) {
    %c0_i32 = arith.constant 0 : i32
    %c0_i32_0 = arith.constant 0 : i32
    %c0_i32_1 = arith.constant 0 : i32
    return %c0_i32, %c0_i32_0 : i32, i32
  }
  func.func @transform_6(%arg0: i32) -> (i32, i32) {
    %c0_i32 = arith.constant 0 : i32
    %c0_i32_0 = arith.constant 0 : i32
    %c0_i32_1 = arith.constant 0 : i32
    return %c0_i32, %c0_i32_0 : i32, i32
  }
  func.func @transform_7(%arg0: i32) -> (i32, i32) {
    %c0_i32 = arith.constant 0 : i32
    %c0_i32_0 = arith.constant 0 : i32
    return %arg0, %c0_i32 : i32, i32
  }
}

</mosaic_0001>

<llo_original>
// kernel: protein_ligand_forward.1
$region0: #{protein_ligand_forward.1}
  #allocation0 [shape = 'u32[]', space=smem, size = 0x4, offset = 0x4, fixed_abs, tag = 'smem constant byte address 0x4 - core index']
  #allocation1 [shape = 'u32[144,128]{1,0:T(1,128)}', space=vmem, size = 0x12000, scoped, tag = 'internal scratch']
  %s0 = inlined_call_operand.vmem [shape: bf16[16,56], index: 0, kind: input, shape index: {}]
  %s1 = inlined_call_operand.vmem [shape: bf16[56,32], index: 1, kind: input, shape index: {}]
  %s2 = inlined_call_operand.vmem [shape: f32[1,32], index: 2, kind: input, shape index: {}]
  %s3 = inlined_call_operand.vmem [shape: bf16[32,16], index: 3, kind: input, shape index: {}]
  %s4 = inlined_call_operand.vmem [shape: f32[1,16], index: 4, kind: input, shape index: {}]
  %s5 = inlined_call_operand.vmem [shape: bf16[16,128], index: 5, kind: input, shape index: {}]
  %s6 = inlined_call_operand.vmem [shape: f32[1,128], index: 6, kind: input, shape index: {}]
  %s7 = inlined_call_operand.vmem [shape: f32[16,128], index: 7, kind: output, shape index: {}]
  %s8 = sld [smem:[#allocation0]]
  $region38: #{protein_ligand_forward.1} parent=0
    _
  %s10 = ssub.s32 1, %s8
  %s11 = scalar_select 0, %s10, %s8
  // Predicated region
  $region2: #{protein_ligand_forward.1} parent=0 // pred_check
    _
  $region3: #{protein_ligand_forward.1} parent=0 // pred_check_branch
    %13 = sbr.rel (0) target = $region5
  $region4: #{protein_ligand_forward.1} parent=0 // pred_region
    _
  $region5: #{protein_ligand_forward.1} parent=0 // pred_fallthru
    _
  // Predicated region
  $region6: #{protein_ligand_forward.1} parent=0 // pred_check
    _
  $region7: #{protein_ligand_forward.1} parent=0 // pred_check_branch
    %15 = sbr.rel (0) target = $region9
  $region8: #{protein_ligand_forward.1} parent=0 // pred_region
    _
  $region9: #{protein_ligand_forward.1} parent=0 // pred_fallthru
    _
  // Predicated region
  $region10: #{protein_ligand_forward.1} parent=0 // pred_check
    _
  $region11: #{protein_ligand_forward.1} parent=0 // pred_check_branch
    %17 = sbr.rel (0) target = $region13
  $region12: #{protein_ligand_forward.1} parent=0 // pred_region
    _
  $region13: #{protein_ligand_forward.1} parent=0 // pred_fallthru
    _
  // Predicated region
  $region14: #{protein_ligand_forward.1} parent=0 // pred_check
    _
  $region15: #{protein_ligand_forward.1} parent=0 // pred_check_branch
    %19 = sbr.rel (0) target = $region17
  $region16: #{protein_ligand_forward.1} parent=0 // pred_region
    _
  $region17: #{protein_ligand_forward.1} parent=0 // pred_fallthru
    _
  // Predicated region
  $region18: #{protein_ligand_forward.1} parent=0 // pred_check
    _
  $region19: #{protein_ligand_forward.1} parent=0 // pred_check_branch
    %21 = sbr.rel (0) target = $region21
  $region20: #{protein_ligand_forward.1} parent=0 // pred_region
    _
  $region21: #{protein_ligand_forward.1} parent=0 // pred_fallthru
    _
  // Predicated region
  $region22: #{protein_ligand_forward.1} parent=0 // pred_check
    _
  $region23: #{protein_ligand_forward.1} parent=0 // pred_check_branch
    %23 = sbr.rel (0) target = $region25
  $region24: #{protein_ligand_forward.1} parent=0 // pred_region
    _
  $region25: #{protein_ligand_forward.1} parent=0 // pred_fallthru
    _
  // Predicated region
  $region26: #{protein_ligand_forward.1} parent=0 // pred_check
    _
  $region27: #{protein_ligand_forward.1} parent=0 // pred_check_branch
    %25 = sbr.rel (0) target = $region29
  $region28: #{protein_ligand_forward.1} parent=0 // pred_region
    _
  $region29: #{protein_ligand_forward.1} parent=0 // pred_fallthru
    _
  %v27 = vld [vmem:[%s0] sm:$0xf]
  %v28 = vld [vmem:[%s0 + $0x4] sm:$0xf]
  %v29 = vld [vmem:[%s1] sm:$0xf]
  %v30 = vld [vmem:[%s1 + $0x4] sm:$0xf]
  %v31 = vld [vmem:[%s1 + $0x8] sm:$0xf]
  %v32 = vld [vmem:[%s1 + $0xc] sm:$0xf]
  %v33 = vld [vmem:[%s1 + $0x10] sm:$0xf]
  %v34 = vld [vmem:[%s1 + $0x14] sm:$0xf]
  %v35 = vld [vmem:[%s1 + $0x18] sm:$0xf]
  %v36 = vld [vmem:[%s2] sm:$0x1]
  %v38 = vlaneseq
  %v39 = vshrl.u32 %v38, 7
  %v40 = vsub.s32 0, %v39
  %v41 = vrot.slane %v36, %v40
  %v45 = vunpack.c.l.b16 %v27
  %v46 = vunpack.c.l.b16 %v28
  %v47 = vpack.c.b16 %v46, %v45
  %v55 = vunpack.c.l.b16 %v29
  %v56 = vunpack.c.l.b16 %v30
  %v57 = vunpack.c.l.b16 %v31
  %v58 = vunpack.c.l.b16 %v32
  %v59 = vunpack.c.l.b16 %v33
  %v60 = vunpack.c.l.b16 %v34
  %v61 = vunpack.c.l.b16 %v35
  %v62 = vpack.c.b16 %v56, %v55
  %v63 = vpack.c.b16 %v58, %v57
  %v64 = vpack.c.b16 %v60, %v59
  %v65 = vpack.c.b16 %v61, %v61
  %vm69 = vcmask 457728
  %v71 = vsel %vm69, %v47, 0
  %vm73 = vcmask 1043456
  %v75 = vsel %vm73, %v65, 0
  %77 = vmatprep.subr.bf16.mxu0 0
  %78 = vmatpush1.bf16.msra.mxu0 %v62
  %79 = vmatprep.subr.bf16.mxu0 0
  %80 = vmatpush1.bf16.msra.mxu0 %v63
  %81 = vmatprep.subr.bf16.mxu0 0
  %82 = vmatpush1.bf16.msra.mxu0 %v64
  %83 = vmatprep.subr.bf16.mxu0 0
  %84 = vmatpush1.bf16.msra.mxu0 %v75
  %85 = vmatprep.subr.bf16.mxu0 0
  %86 = vmatpush1.bf16.msra.mxu0 0
  %87 = vmatprep.subr.bf16.mxu0 0
  %88 = vmatpush1.bf16.msra.mxu0 0
  %89 = vmatprep.subr.bf16.mxu0 0
  %90 = vmatpush1.bf16.msra.mxu0 0
  %91 = vmatprep.subr.bf16.mxu0 0
  %92 = vmatpush1.bf16.msra.mxu0 0
  %93 = vmatprep.subr.bf16.mxu0 0
  %94 = vmatpush1.bf16.msra.mxu0 0
  %95 = vmatprep.subr.bf16.mxu0 0
  %96 = vmatpush1.bf16.msra.mxu0 0
  %97 = vmatprep.subr.bf16.mxu0 0
  %98 = vmatpush1.bf16.msra.mxu0 0
  %99 = vmatprep.subr.bf16.mxu0 0
  %100 = vmatpush1.bf16.msra.mxu0 0
  %101 = vmatprep.subr.bf16.mxu0 0
  %102 = vmatpush1.bf16.msra.mxu0 0
  %103 = vmatprep.subr.bf16.mxu0 0
  %104 = vmatpush1.bf16.msra.mxu0 0
  %105 = vmatprep.subr.bf16.mxu0 0
  %106 = vmatpush1.bf16.msra.mxu0 0
  %107 = vmatprep.subr.bf16.mxu0 0
  %108 = vmatpush1.bf16.msra.mxu0 0
  %109 = vmatprep.mubr.bf16.mxu0 0
  %110 = vmatmul.mubr.bf16.gmra.mrb[0].mxu0 %v71
  %v111 = vpop.f32.mrb[0].mxu0
  %v112 = vadd.f32 %v41, %v111
  %v113 = vpop.f32.mrb[0].mxu0
  %v114 = vpop.f32.mrb[0].mxu0
  %v115 = vadd.f32 %v41, %v114
  %v116 = vpop.f32.mrb[0].mxu0
  %117 = vdwg.mxu0
  %v118 = vmax.f32 %v112, 0.0
  %v119 = vmax.f32 %v115, 0.0
  %v120 = vpack.c.bf16 %v119, %v118
  %v121 = vld [vmem:[%s3] sm:$0xf]
  %v122 = vld [vmem:[%s3 + $0x4] sm:$0xf]
  %v123 = vld [vmem:[%s3 + $0x8] sm:$0xf]
  %v124 = vld [vmem:[%s3 + $0xc] sm:$0xf]
  %v125 = vld [vmem:[%s4] sm:$0x1]
  %v127 = vlaneseq
  %v128 = vshrl.u32 %v127, 7
  %v129 = vsub.s32 0, %v128
  %v130 = vrot.slane %v125, %v129
  %v136 = vunpack.c.l.b16 %v121
  %v137 = vunpack.c.l.b16 %v122
  %v138 = vunpack.c.l.b16 %v123
  %v139 = vunpack.c.l.b16 %v124
  %v140 = vpack.c.b16 %v137, %v136
  %v141 = vpack.c.b16 %v139, %v138
  %vm144 = vcmask 261120
  %v146 = vsel %vm144, %v120, 0
  %148 = vmatprep.subr.bf16.mxu0 0
  %149 = vmatpush1.bf16.msra.mxu0 %v140
  %150 = vmatprep.subr.bf16.mxu0 0
  %151 = vmatpush1.bf16.msra.mxu0 %v141
  %152 = vmatprep.subr.bf16.mxu0 0
  %153 = vmatpush1.bf16.msra.mxu0 0
  %154 = vmatprep.subr.bf16.mxu0 0
  %155 = vmatpush1.bf16.msra.mxu0 0
  %156 = vmatprep.subr.bf16.mxu0 0
  %157 = vmatpush1.bf16.msra.mxu0 0
  %158 = vmatprep.subr.bf16.mxu0 0
  %159 = vmatpush1.bf16.msra.mxu0 0
  %160 = vmatprep.subr.bf16.mxu0 0
  %161 = vmatpush1.bf16.msra.mxu0 0
  %162 = vmatprep.subr.bf16.mxu0 0
  %163 = vmatpush1.bf16.msra.mxu0 0
  %164 = vmatprep.subr.bf16.mxu0 0
  %165 = vmatpush1.bf16.msra.mxu0 0
  %166 = vmatprep.subr.bf16.mxu0 0
  %167 = vmatpush1.bf16.msra.mxu0 0
  %168 = vmatprep.subr.bf16.mxu0 0
  %169 = vmatpush1.bf16.msra.mxu0 0
  %170 = vmatprep.subr.bf16.mxu0 0
  %171 = vmatpush1.bf16.msra.mxu0 0
  %172 = vmatprep.subr.bf16.mxu0 0
  %173 = vmatpush1.bf16.msra.mxu0 0
  %174 = vmatprep.subr.bf16.mxu0 0
  %175 = vmatpush1.bf16.msra.mxu0 0
  %176 = vmatprep.subr.bf16.mxu0 0
  %177 = vmatpush1.bf16.msra.mxu0 0
  %178 = vmatprep.subr.bf16.mxu0 0
  %179 = vmatpush1.bf16.msra.mxu0 0
  %180 = vmatprep.mubr.bf16.mxu0 0
  %181 = vmatmul.mubr.bf16.gmra.mrb[0].mxu0 %v146
  %v182 = vpop.f32.mrb[0].mxu0
  %v183 = vadd.f32 %v130, %v182
  %v184 = vpop.f32.mrb[0].mxu0
  %v185 = vpop.f32.mrb[0].mxu0
  %v186 = vadd.f32 %v130, %v185
  %v187 = vpop.f32.mrb[0].mxu0
  %188 = vdwg.mxu0
  %v189 = vmax.f32 %v183, 0.0
  %v190 = vmax.f32 %v186, 0.0
  %v191 = vpack.c.bf16 %v190, %v189
  %v192 = vld [vmem:[%s5] sm:$0xf]
  %v193 = vld [vmem:[%s5 + $0x4] sm:$0xf]
  %v194 = vld [vmem:[%s6] sm:$0x1]
  %v196 = vlaneseq
  %v197 = vshrl.u32 %v196, 7
  %v198 = vsub.s32 0, %v197
  %v199 = vrot.slane %v194, %v198
  %v203 = vunpack.c.l.b16 %v192
  %v204 = vunpack.c.l.b16 %v193
  %v205 = vpack.c.b16 %v204, %v203
  %vm207 = vcmask 130048
  %v209 = vsel %vm207, %v191, 0
  %211 = vmatprep.subr.bf16.mxu0 0
  %212 = vmatpush1.bf16.msra.mxu0 %v205
  %213 = vmatprep.subr.bf16.mxu0 0
  %214 = vmatpush1.bf16.msra.mxu0 0
  %215 = vmatprep.subr.bf16.mxu0 0
  %216 = vmatpush1.bf16.msra.mxu0 0
  %217 = vmatprep.subr.bf16.mxu0 0
  %218 = vmatpush1.bf16.msra.mxu0 0
  %219 = vmatprep.subr.bf16.mxu0 0
  %220 = vmatpush1.bf16.msra.mxu0 0
  %221 = vmatprep.subr.bf16.mxu0 0
  %222 = vmatpush1.bf16.msra.mxu0 0
  %223 = vmatprep.subr.bf16.mxu0 0
  %224 = vmatpush1.bf16.msra.mxu0 0
  %225 = vmatprep.subr.bf16.mxu0 0
  %226 = vmatpush1.bf16.msra.mxu0 0
  %227 = vmatprep.subr.bf16.mxu0 0
  %228 = vmatpush1.bf16.msra.mxu0 0
  %229 = vmatprep.subr.bf16.mxu0 0
  %230 = vmatpush1.bf16.msra.mxu0 0
  %231 = vmatprep.subr.bf16.mxu0 0
  %232 = vmatpush1.bf16.msra.mxu0 0
  %233 = vmatprep.subr.bf16.mxu0 0
  %234 = vmatpush1.bf16.msra.mxu0 0
  %235 = vmatprep.subr.bf16.mxu0 0
  %236 = vmatpush1.bf16.msra.mxu0 0
  %237 = vmatprep.subr.bf16.mxu0 0
  %238 = vmatpush1.bf16.msra.mxu0 0
  %239 = vmatprep.subr.bf16.mxu0 0
  %240 = vmatpush1.bf16.msra.mxu0 0
  %241 = vmatprep.subr.bf16.mxu0 0
  %242 = vmatpush1.bf16.msra.mxu0 0
  %243 = vmatprep.mubr.bf16.mxu0 0
  %244 = vmatmul.mubr.bf16.gmra.mrb[0].mxu0 %v209
  %v245 = vpop.f32.mrb[0].mxu0
  %v246 = vadd.f32 %v199, %v245
  %v247 = vpop.f32.mrb[0].mxu0
  %v248 = vpop.f32.mrb[0].mxu0
  %v249 = vadd.f32 %v199, %v248
  %v250 = vpop.f32.mrb[0].mxu0
  %251 = vdwg.mxu0
  %252 = vst [vmem:[%s7] sm:$0xff] %v246
  %253 = vst [vmem:[%s7 + $0x8] sm:$0xff] %v249
  // Predicated region
  $region30: #{protein_ligand_forward.1} parent=0 // pred_check
    _
  $region31: #{protein_ligand_forward.1} parent=0 // pred_check_branch
    %255 = sbr.rel (0) target = $region33
  $region32: #{protein_ligand_forward.1} parent=0 // pred_region
    _
  $region33: #{protein_ligand_forward.1} parent=0 // pred_fallthru
    _
  // Predicated region
  $region34: #{protein_ligand_forward.1} parent=0 // pred_check
    _
  $region35: #{protein_ligand_forward.1} parent=0 // pred_check_branch
    %257 = sbr.rel (0) target = $region37
  $region36: #{protein_ligand_forward.1} parent=0 // pred_region
    _
  $region37: #{protein_ligand_forward.1} parent=0 // pred_fallthru
    _

</llo_original>
